<compile_context>
chip_gen: v6e
topology: v6e:2x2x1
jax: 0.10.0
libtpu: 0.0.40
codegen_flags: <defaults>
</compile_context>

<pallas_src>
import functools

import jax
import jax.numpy as jnp
from jax import lax
from jax.experimental import pallas as pl
from jax.experimental.pallas import tpu as pltpu

_H1 = 256   # first hidden width
_H2 = 64    # second hidden width
_NP = 128   # lane-dense padded width for hidden2 / action dims


def _dqn_kernel(ids_ref, w1_ref, w2_ref, w3_ref, bias_ref, o_ref):
    """One batch-block of the DQN forward.

    ids_ref : VMEM [TB, 1]   int32
    w1_ref  : VMEM [S, 256]  f32
    w2_ref  : VMEM [256,128] f32   (hidden2 dim zero-padded 64 -> 128)
    w3_ref  : VMEM [128,128] f32   (rows 64.. and action cols zero-padded)
    bias_ref: VMEM [3, 256]  f32   (row0=b1, row1=b2|0, row2=b3|0)
    o_ref   : VMEM [TB, 128] f32
    """
    TB = o_ref.shape[0]
    S = w1_ref.shape[0]

    # Vectorized one-hot: (TB,1) ids vs 2-D iota -> (TB,S) f32 tile in vregs.
    ids = ids_ref[...]                                    # (TB, 1) int32
    cols = lax.broadcasted_iota(jnp.int32, (TB, S), 1)    # (TB, S)
    one_hot = (cols == ids).astype(jnp.float32)           # OOR id -> zero row

    b1 = bias_ref[0:1, :]        # (1, 256)
    b2 = bias_ref[1:2, :_NP]     # (1, 128), zeros past H2
    b3 = bias_ref[2:3, :_NP]     # (1, 128), zeros past A

    # Linear(S, 256) + ReLU   (one_hot @ W1 on the MXU)
    h1 = jnp.dot(one_hot, w1_ref[...], preferred_element_type=jnp.float32) + b1
    h1 = jnp.maximum(h1, 0.0)

    # Linear(256, 64) + ReLU  (lane-padded to 128; padded lanes stay exactly 0)
    h2 = jnp.dot(h1, w2_ref[...], preferred_element_type=jnp.float32) + b2
    h2 = jnp.maximum(h2, 0.0)

    # Linear(64, action_dim)  (padded rows/cols of W3 are zero -> exact)
    o_ref[...] = jnp.dot(h2, w3_ref[...], preferred_element_type=jnp.float32) + b3


def _round_up(x, m):
    return -(-x // m) * m


@functools.partial(jax.jit, static_argnames=("block_b",))
def dqn_multiple_forward(x_ids, params, block_b=None):
    """x_ids: int [B] state indices. params: dict of weights/biases."""
    w1, b1 = params["w1"], params["b1"]
    w2, b2 = params["w2"], params["b2"]
    w3, b3 = params["w3"], params["b3"]

    S, H1 = w1.shape
    H2 = w2.shape[1]
    A = w3.shape[1]
    B = x_ids.shape[0]
    assert H1 == _H1 and H2 == _H2 and A <= _NP

    # Batch block: multiple of 8 sublanes; >= 2 grid steps when B >= 16 so both
    # v7x TensorCores get work; capped at 512 rows to amortize step overhead.
    if block_b is None:
        b8 = _round_up(B, 8)
        if b8 <= 8:
            block_b = 8
        else:
            block_b = max(8, min(512, _round_up(-(-b8 // 2), 8)))
    TB = block_b
    Bp = pl.cdiv(B, TB) * TB

    # Pad ids with -1 so padded rows produce an all-zero one-hot (discarded).
    ids = jnp.full((Bp, 1), -1, jnp.int32).at[:B, 0].set(x_ids.astype(jnp.int32))

    # Zero-padded, lane-dense weights + one packed bias operand.
    w1f = w1.astype(jnp.float32)                                          # (S, 256)
    w2p = jnp.pad(w2.astype(jnp.float32), ((0, 0), (0, _NP - H2)))        # (256, 128)
    w3p = jnp.pad(w3.astype(jnp.float32), ((0, _NP - H2), (0, _NP - A)))  # (128, 128)
    bias = jnp.zeros((3, _H1), jnp.float32)
    bias = bias.at[0, :H1].set(b1.reshape(-1).astype(jnp.float32))
    bias = bias.at[1, :H2].set(b2.reshape(-1).astype(jnp.float32))
    bias = bias.at[2, :A].set(b3.reshape(-1).astype(jnp.float32))

    grid_spec = pltpu.PrefetchScalarGridSpec(
        num_scalar_prefetch=0,
        grid=(Bp // TB,),
        in_specs=[
            pl.BlockSpec((TB, 1), lambda i: (i, 0)),      # ids (per-block)
            pl.BlockSpec((S, _H1), lambda i: (0, 0)),     # w1 (VMEM-resident)
            pl.BlockSpec((_H1, _NP), lambda i: (0, 0)),   # w2 (padded)
            pl.BlockSpec((_NP, _NP), lambda i: (0, 0)),   # w3 (padded)
            pl.BlockSpec((3, _H1), lambda i: (0, 0)),     # packed biases
        ],
        out_specs=pl.BlockSpec((TB, _NP), lambda i: (i, 0)),
        scratch_shapes=[],
    )

    out = pl.pallas_call(
        _dqn_kernel,
        out_shape=jax.ShapeDtypeStruct((Bp, _NP), jnp.float32),
        grid_spec=grid_spec,
        compiler_params=pltpu.CompilerParams(dimension_semantics=("parallel",)),
    )(ids, w1f, w2p, w3p, bias)

    return out[:B, :A]


def init_params(state_dim, action_dim, key):
    """Deterministic init matching nn.Linear shapes (uniform +-1/sqrt(fan_in))."""
    ks = jax.random.split(key, 6)

    def linear(kw, kb, fan_in, fan_out):
        bound = 1.0 / jnp.sqrt(fan_in)
        w = jax.random.uniform(kw, (fan_in, fan_out), jnp.float32, -bound, bound)
        b = jax.random.uniform(kb, (1, fan_out), jnp.float32, -bound, bound)
        return w, b

    w1, b1 = linear(ks[0], ks[1], state_dim, 256)
    w2, b2 = linear(ks[2], ks[3], 256, 64)
    w3, b3 = linear(ks[4], ks[5], 64, action_dim)
    return {"w1": w1, "b1": b1, "w2": w2, "b2": b2, "w3": w3, "b3": b3}


def _ref_forward(x_ids, params):
    # one_hot(x) @ W1 + b1  ==  W1[x, :] + b1  (exactly, for in-range x).
    h1 = jnp.maximum(params["w1"][x_ids] + params["b1"], 0.0)
    h2 = jnp.dot(h1, params["w2"], precision=lax.Precision.HIGHEST) + params["b2"]
    h2 = jnp.maximum(h2, 0.0)
    return jnp.dot(h2, params["w3"], precision=lax.Precision.HIGHEST) + params["b3"]


if __name__ == "__main__":
    state_dim = 32
    action_dim = 4
    batch = 8

    key = jax.random.PRNGKey(0)
    k_ids, k_params = jax.random.split(key)

    params = init_params(state_dim, action_dim, k_params)
    x_ids = jax.random.randint(k_ids, (batch,), 0, state_dim, dtype=jnp.int32)

    out = dqn_multiple_forward(x_ids, params)
    out = jax.block_until_ready(out)

    ref = _ref_forward(x_ids, params)
    assert out.shape == (batch, action_dim), out.shape
    max_err = float(jnp.max(jnp.abs(out - ref)))
    assert jnp.allclose(out, ref, atol=1e-3, rtol=1e-3), max_err

    print("KERNEL_OK")
</pallas_src>

<mosaic_0001>
module attributes {stable_mosaic.version = 11 : i64} {
  func.func @_dqn_kernel(%arg0: i32, %arg1: memref<8x1xi32, #tpu.memory_space<vmem>>, %arg2: memref<32x256xf32, #tpu.memory_space<vmem>>, %arg3: memref<256x128xf32, #tpu.memory_space<vmem>>, %arg4: memref<128x128xf32, #tpu.memory_space<vmem>>, %arg5: memref<3x256xf32, #tpu.memory_space<vmem>>, %arg6: memref<8x128xf32, #tpu.memory_space<vmem>>) attributes {dimension_semantics = [#tpu.dimension_semantics<parallel>], iteration_bounds = array<i64: 1>, scalar_prefetch = 0 : i64, scratch_operands = 0 : i64, tpu.core_type = #tpu.core_type<tc>, window_params = [{transform_indices = @transform_0, window_bounds = array<i64: 8, 1>}, {pipeline_mode = #tpu.pipeline_mode<synchronous>, transform_indices = @transform_1, window_bounds = array<i64: 32, 256>}, {pipeline_mode = #tpu.pipeline_mode<synchronous>, transform_indices = @transform_2, window_bounds = array<i64: 256, 128>}, {pipeline_mode = #tpu.pipeline_mode<synchronous>, transform_indices = @transform_3, window_bounds = array<i64: 128, 128>}, {pipeline_mode = #tpu.pipeline_mode<synchronous>, transform_indices = @transform_4, window_bounds = array<i64: 3, 256>}, {transform_indices = @transform_5, window_bounds = array<i64: 8, 128>}]} {
    %c0 = arith.constant 0 : index
    %c0_0 = arith.constant 0 : index
    %0 = vector.load %arg1[%c0, %c0_0] : memref<8x1xi32, #tpu.memory_space<vmem>>, vector<8x1xi32>
    %1 = tpu.iota {dimensions = array<i32: 1>} : vector<8x32xi32>
    %2 = vector.broadcast %0 : vector<8x1xi32> to vector<8x32xi32>
    %3 = arith.cmpi eq, %1, %2 : vector<8x32xi32>
    %4 = arith.extui %3 : vector<8x32xi1> to vector<8x32xi32>
    %5 = arith.sitofp %4 : vector<8x32xi32> to vector<8x32xf32>
    %c0_1 = arith.constant 0 : index
    %c0_2 = arith.constant 0 : index
    %6 = vector.load %arg5[%c0_1, %c0_2] : memref<3x256xf32, #tpu.memory_space<vmem>>, vector<1x256xf32>
    %c1 = arith.constant 1 : index
    %c0_3 = arith.constant 0 : index
    %7 = vector.load %arg5[%c1, %c0_3] : memref<3x256xf32, #tpu.memory_space<vmem>>, vector<1x128xf32>
    %c2 = arith.constant 2 : index
    %c0_4 = arith.constant 0 : index
    %8 = vector.load %arg5[%c2, %c0_4] : memref<3x256xf32, #tpu.memory_space<vmem>>, vector<1x128xf32>
    %c0_5 = arith.constant 0 : index
    %c0_6 = arith.constant 0 : index
    %9 = vector.load %arg2[%c0_5, %c0_6] : memref<32x256xf32, #tpu.memory_space<vmem>>, vector<32x256xf32>
    %cst = arith.constant dense<0.000000e+00> : vector<8x256xf32>
    %10 = tpu.matmul %5, %9, %cst {dimension_numbers = #tpu.dot_dimension_numbers<[1], [0], [0], [1], [0, 0, 1, 1], [], []>} : vector<8x32xf32>, vector<32x256xf32>, vector<8x256xf32> -> vector<8x256xf32>
    %11 = vector.broadcast %6 : vector<1x256xf32> to vector<8x256xf32>
    %12 = arith.addf %10, %11 : vector<8x256xf32>
    %cst_7 = arith.constant 0.000000e+00 : f32
    %13 = vector.broadcast %cst_7 : f32 to vector<8x256xf32>
    %14 = arith.maximumf %12, %13 : vector<8x256xf32>
    %c0_8 = arith.constant 0 : index
    %c0_9 = arith.constant 0 : index
    %15 = vector.load %arg3[%c0_8, %c0_9] : memref<256x128xf32, #tpu.memory_space<vmem>>, vector<256x128xf32>
    %cst_10 = arith.constant dense<0.000000e+00> : vector<8x128xf32>
    %16 = tpu.matmul %14, %15, %cst_10 {dimension_numbers = #tpu.dot_dimension_numbers<[1], [0], [0], [1], [0, 0, 1, 1], [], []>} : vector<8x256xf32>, vector<256x128xf32>, vector<8x128xf32> -> vector<8x128xf32>
    %17 = vector.broadcast %7 : vector<1x128xf32> to vector<8x128xf32>
    %18 = arith.addf %16, %17 : vector<8x128xf32>
    %cst_11 = arith.constant 0.000000e+00 : f32
    %19 = vector.broadcast %cst_11 : f32 to vector<8x128xf32>
    %20 = arith.maximumf %18, %19 : vector<8x128xf32>
    %c0_12 = arith.constant 0 : index
    %c0_13 = arith.constant 0 : index
    %21 = vector.load %arg4[%c0_12, %c0_13] : memref<128x128xf32, #tpu.memory_space<vmem>>, vector<128x128xf32>
    %cst_14 = arith.constant dense<0.000000e+00> : vector<8x128xf32>
    %22 = tpu.matmul %20, %21, %cst_14 {dimension_numbers = #tpu.dot_dimension_numbers<[1], [0], [0], [1], [0, 0, 1, 1], [], []>} : vector<8x128xf32>, vector<128x128xf32>, vector<8x128xf32> -> vector<8x128xf32>
    %23 = vector.broadcast %8 : vector<1x128xf32> to vector<8x128xf32>
    %24 = arith.addf %22, %23 : vector<8x128xf32>
    %c0_15 = arith.constant 0 : index
    %c0_16 = arith.constant 0 : index
    %25 = vector.load %arg6[%c0_15, %c0_16] : memref<8x128xf32, #tpu.memory_space<vmem>>, vector<8x128xf32>
    tpu.vector_store %arg6[%c0_15, %c0_16], %24 {strides = array<i32>} : memref<8x128xf32, #tpu.memory_space<vmem>>, vector<8x128xf32>,
    return
  }
  func.func @transform_0(%arg0: i32) -> (i32, i32) {
    %c0_i32 = arith.constant 0 : i32
    %c0_i32_0 = arith.constant 0 : i32
    return %arg0, %c0_i32 : i32, i32
  }
  func.func @transform_1(%arg0: i32) -> (i32, i32) {
    %c0_i32 = arith.constant 0 : i32
    %c0_i32_0 = arith.constant 0 : i32
    %c0_i32_1 = arith.constant 0 : i32
    return %c0_i32, %c0_i32_0 : i32, i32
  }
  func.func @transform_2(%arg0: i32) -> (i32, i32) {
    %c0_i32 = arith.constant 0 : i32
    %c0_i32_0 = arith.constant 0 : i32
    %c0_i32_1 = arith.constant 0 : i32
    return %c0_i32, %c0_i32_0 : i32, i32
  }
  func.func @transform_3(%arg0: i32) -> (i32, i32) {
    %c0_i32 = arith.constant 0 : i32
    %c0_i32_0 = arith.constant 0 : i32
    %c0_i32_1 = arith.constant 0 : i32
    return %c0_i32, %c0_i32_0 : i32, i32
  }
  func.func @transform_4(%arg0: i32) -> (i32, i32) {
    %c0_i32 = arith.constant 0 : i32
    %c0_i32_0 = arith.constant 0 : i32
    %c0_i32_1 = arith.constant 0 : i32
    return %c0_i32, %c0_i32_0 : i32, i32
  }
  func.func @transform_5(%arg0: i32) -> (i32, i32) {
    %c0_i32 = arith.constant 0 : i32
    %c0_i32_0 = arith.constant 0 : i32
    return %arg0, %c0_i32 : i32, i32
  }
}

</mosaic_0001>

<llo_original>
// kernel: dqn_multiple_forward.1
$region0: #{dqn_multiple_forward.1}
  #allocation0 [shape = 'u32[]', space=smem, size = 0x4, offset = 0x4, fixed_abs, tag = 'smem constant byte address 0x4 - core index']
  #allocation1 [shape = 'u32[144,128]{1,0:T(1,128)}', space=vmem, size = 0x12000, scoped, tag = 'internal scratch']
  %s0 = inlined_call_operand.vmem [shape: s32[8,1], index: 0, kind: input, shape index: {}]
  %s1 = inlined_call_operand.vmem [shape: f32[32,256], index: 1, kind: input, shape index: {}]
  %s2 = inlined_call_operand.vmem [shape: f32[256,128], index: 2, kind: input, shape index: {}]
  %s3 = inlined_call_operand.vmem [shape: f32[128,128], index: 3, kind: input, shape index: {}]
  %s4 = inlined_call_operand.vmem [shape: f32[3,256], index: 4, kind: input, shape index: {}]
  %s5 = inlined_call_operand.vmem [shape: f32[8,128], index: 5, kind: output, shape index: {}]
  %s6 = sld [smem:[#allocation0]]
  $region30: #{dqn_multiple_forward.1} parent=0
    _
  %s8 = ssub.s32 1, %s6
  %s9 = scalar_select 0, %s8, %s6
  // Predicated region
  $region2: #{dqn_multiple_forward.1} parent=0 // pred_check
    _
  $region3: #{dqn_multiple_forward.1} parent=0 // pred_check_branch
    %11 = sbr.rel (0) target = $region5
  $region4: #{dqn_multiple_forward.1} parent=0 // pred_region
    _
  $region5: #{dqn_multiple_forward.1} parent=0 // pred_fallthru
    _
  // Predicated region
  $region6: #{dqn_multiple_forward.1} parent=0 // pred_check
    _
  $region7: #{dqn_multiple_forward.1} parent=0 // pred_check_branch
    %13 = sbr.rel (0) target = $region9
  $region8: #{dqn_multiple_forward.1} parent=0 // pred_region
    _
  $region9: #{dqn_multiple_forward.1} parent=0 // pred_fallthru
    _
  // Predicated region
  $region10: #{dqn_multiple_forward.1} parent=0 // pred_check
    _
  $region11: #{dqn_multiple_forward.1} parent=0 // pred_check_branch
    %15 = sbr.rel (0) target = $region13
  $region12: #{dqn_multiple_forward.1} parent=0 // pred_region
    _
  $region13: #{dqn_multiple_forward.1} parent=0 // pred_fallthru
    _
  // Predicated region
  $region14: #{dqn_multiple_forward.1} parent=0 // pred_check
    _
  $region15: #{dqn_multiple_forward.1} parent=0 // pred_check_branch
    %17 = sbr.rel (0) target = $region17
  $region16: #{dqn_multiple_forward.1} parent=0 // pred_region
    _
  $region17: #{dqn_multiple_forward.1} parent=0 // pred_fallthru
    _
  // Predicated region
  $region18: #{dqn_multiple_forward.1} parent=0 // pred_check
    _
  $region19: #{dqn_multiple_forward.1} parent=0 // pred_check_branch
    %19 = sbr.rel (0) target = $region21
  $region20: #{dqn_multiple_forward.1} parent=0 // pred_region
    _
  $region21: #{dqn_multiple_forward.1} parent=0 // pred_fallthru
    _
  %v20 = vld [vmem:[%s0] sm:$0xff]
  %v21 = vlaneseq
  %v22 = vand.u32 %v21, 127
  %23 = vset.pattern.permute.xlu0 0
  %24 = vperm.xlu0 %23, %v20
  %v25 = vpop.permute.xlu0 %24
  %vm26 = vcmp.eq.s32.totalorder %v22, %v25
  %v27 = vsel %vm26, 1, 0
  %v28 = vcvt.s32.f32 %v27
  %v29 = vld [vmem:[%s4] ss:$4 sm:$0x3]
  %v30 = vld [vmem:[%s4 + $0x1] sm:$0x1]
  %v31 = vld [vmem:[%s4 + $0x2] sm:$0x1]
  %v32 = vld [vmem:[%s1] sm:$0xff]
  %v33 = vld [vmem:[%s1 + $0x8] sm:$0xff]
  %v34 = vld [vmem:[%s1 + $0x10] sm:$0xff]
  %v35 = vld [vmem:[%s1 + $0x18] sm:$0xff]
  %v36 = vld [vmem:[%s1 + $0x20] sm:$0xff]
  %v37 = vld [vmem:[%s1 + $0x28] sm:$0xff]
  %v38 = vld [vmem:[%s1 + $0x30] sm:$0xff]
  %v39 = vld [vmem:[%s1 + $0x38] sm:$0xff]
  %v41 = vlaneseq
  %v42 = vshrl.u32 %v41, 7
  %v43 = vsub.s32 0, %v42
  %v44 = vrot.slane %v29, %v43
  %v45 = vlaneseq
  %v46 = vshrl.u32 %v45, 7
  %v47 = vsub.s32 1, %v46
  %v48 = vrot.slane %v29, %v47
  %vm51 = vcmask 261120
  %v53 = vsel %vm51, %v28, 0
  %55 = vmatprep.subr.mxu0 0.0
  %56 = vmatpush1.msra.mxu0 0.0
  %57 = vmatprep.subr.mxu0 0.0
  %58 = vmatpush1.msra.mxu0 0.0
  %59 = vmatprep.subr.mxu0 0.0
  %60 = vmatpush1.msra.mxu0 0.0
  %61 = vmatprep.subr.mxu0 0.0
  %62 = vmatpush1.msra.mxu0 0.0
  %63 = vmatprep.subr.mxu0 0.0
  %64 = vmatpush1.msra.mxu0 0.0
  %65 = vmatprep.subr.mxu0 0.0
  %66 = vmatpush1.msra.mxu0 0.0
  %67 = vmatprep.subr.mxu0 0.0
  %68 = vmatpush1.msra.mxu0 0.0
  %69 = vmatprep.subr.mxu0 0.0
  %70 = vmatpush1.msra.mxu0 0.0
  %71 = vmatprep.subr.mxu0 0.0
  %72 = vmatpush1.msra.mxu0 0.0
  %73 = vmatprep.subr.mxu0 0.0
  %74 = vmatpush1.msra.mxu0 0.0
  %75 = vmatprep.subr.mxu0 0.0
  %76 = vmatpush1.msra.mxu0 0.0
  %77 = vmatprep.subr.mxu0 0.0
  %78 = vmatpush1.msra.mxu0 0.0
  %79 = vmatprep.subr.mxu0 %v39
  %80 = vmatpush1.msra.mxu0 %v38
  %81 = vmatprep.subr.mxu0 %v37
  %82 = vmatpush1.msra.mxu0 %v36
  %83 = vmatprep.subr.mxu0 %v35
  %84 = vmatpush1.msra.mxu0 %v34
  %85 = vmatprep.subr.mxu0 %v33
  %86 = vmatpush1.msra.mxu0 %v32
  %87 = vmatprep.subr.mxu0 0.0
  %88 = vmatpush2.msra.mxu0 0.0
  %89 = vmatprep.subr.mxu0 0.0
  %90 = vmatpush2.msra.mxu0 0.0
  %91 = vmatprep.subr.mxu0 0.0
  %92 = vmatpush2.msra.mxu0 0.0
  %93 = vmatprep.subr.mxu0 0.0
  %94 = vmatpush2.msra.mxu0 0.0
  %95 = vmatprep.subr.mxu0 0.0
  %96 = vmatpush2.msra.mxu0 0.0
  %97 = vmatprep.subr.mxu0 0.0
  %98 = vmatpush2.msra.mxu0 0.0
  %99 = vmatprep.subr.mxu0 0.0
  %100 = vmatpush2.msra.mxu0 0.0
  %101 = vmatprep.subr.mxu0 0.0
  %102 = vmatpush2.msra.mxu0 0.0
  %103 = vmatprep.subr.mxu0 0.0
  %104 = vmatpush2.msra.mxu0 0.0
  %105 = vmatprep.subr.mxu0 0.0
  %106 = vmatpush2.msra.mxu0 0.0
  %107 = vmatprep.subr.mxu0 0.0
  %108 = vmatpush2.msra.mxu0 0.0
  %109 = vmatprep.subr.mxu0 0.0
  %110 = vmatpush2.msra.mxu0 0.0
  %111 = vmatprep.subr.mxu0 0.0
  %112 = vmatpush2.msra.mxu0 0.0
  %113 = vmatprep.subr.mxu0 0.0
  %114 = vmatpush2.msra.mxu0 0.0
  %115 = vmatprep.subr.mxu0 0.0
  %116 = vmatpush2.msra.mxu0 0.0
  %117 = vmatprep.subr.mxu0 0.0
  %118 = vmatpush2.msra.mxu0 0.0
  %119 = vmatprep.mubr.f32.mxu0 0.0
  %120 = vmatmul.mubr.f32.gmra.mxu0 %v53
  %v121 = vpop.f32.mrf.mxu0
  %v122 = vadd.f32 %v44, %v121
  %v123 = vpop.f32.mrf.mxu0
  %v124 = vadd.f32 %v48, %v123
  %125 = vdwg.mxu0
  %v126 = vmax.f32 %v122, 0.0
  %v127 = vmax.f32 %v124, 0.0
  %v128 = vld [vmem:[%s2] sm:$0xff]
  %v129 = vld [vmem:[%s2 + $0x8] sm:$0xff]
  %v130 = vld [vmem:[%s2 + $0x10] sm:$0xff]
  %v131 = vld [vmem:[%s2 + $0x18] sm:$0xff]
  %v132 = vld [vmem:[%s2 + $0x20] sm:$0xff]
  %v133 = vld [vmem:[%s2 + $0x28] sm:$0xff]
  %v134 = vld [vmem:[%s2 + $0x30] sm:$0xff]
  %v135 = vld [vmem:[%s2 + $0x38] sm:$0xff]
  %v136 = vld [vmem:[%s2 + $0x40] sm:$0xff]
  %v137 = vld [vmem:[%s2 + $0x48] sm:$0xff]
  %v138 = vld [vmem:[%s2 + $0x50] sm:$0xff]
  %v139 = vld [vmem:[%s2 + $0x58] sm:$0xff]
  %v140 = vld [vmem:[%s2 + $0x60] sm:$0xff]
  %v141 = vld [vmem:[%s2 + $0x68] sm:$0xff]
  %v142 = vld [vmem:[%s2 + $0x70] sm:$0xff]
  %v143 = vld [vmem:[%s2 + $0x78] sm:$0xff]
  %v144 = vld [vmem:[%s2 + $0x80] sm:$0xff]
  %v145 = vld [vmem:[%s2 + $0x88] sm:$0xff]
  %v146 = vld [vmem:[%s2 + $0x90] sm:$0xff]
  %v147 = vld [vmem:[%s2 + $0x98] sm:$0xff]
  %v148 = vld [vmem:[%s2 + $0xa0] sm:$0xff]
  %v149 = vld [vmem:[%s2 + $0xa8] sm:$0xff]
  %v150 = vld [vmem:[%s2 + $0xb0] sm:$0xff]
  %v151 = vld [vmem:[%s2 + $0xb8] sm:$0xff]
  %v152 = vld [vmem:[%s2 + $0xc0] sm:$0xff]
  %v153 = vld [vmem:[%s2 + $0xc8] sm:$0xff]
  %v154 = vld [vmem:[%s2 + $0xd0] sm:$0xff]
  %v155 = vld [vmem:[%s2 + $0xd8] sm:$0xff]
  %v156 = vld [vmem:[%s2 + $0xe0] sm:$0xff]
  %v157 = vld [vmem:[%s2 + $0xe8] sm:$0xff]
  %v158 = vld [vmem:[%s2 + $0xf0] sm:$0xff]
  %v159 = vld [vmem:[%s2 + $0xf8] sm:$0xff]
  %v160 = vlaneseq
  %v161 = vshrl.u32 %v160, 7
  %v162 = vsub.s32 0, %v161
  %v163 = vrot.slane %v30, %v162
  %164 = vmatprep.subr.mxu0 0.0
  %165 = vmatpush1.msra.mxu0 %v143
  %166 = vmatprep.subr.mxu0 0.0
  %167 = vmatpush1.msra.mxu0 %v142
  %168 = vmatprep.subr.mxu0 0.0
  %169 = vmatpush1.msra.mxu0 %v141
  %170 = vmatprep.subr.mxu0 0.0
  %171 = vmatpush1.msra.mxu0 %v140
  %172 = vmatprep.subr.mxu0 0.0
  %173 = vmatpush1.msra.mxu0 %v139
  %174 = vmatprep.subr.mxu0 0.0
  %175 = vmatpush1.msra.mxu0 %v138
  %176 = vmatprep.subr.mxu0 0.0
  %177 = vmatpush1.msra.mxu0 %v137
  %178 = vmatprep.subr.mxu0 0.0
  %179 = vmatpush1.msra.mxu0 %v136
  %180 = vmatprep.subr.mxu0 0.0
  %181 = vmatpush1.msra.mxu0 %v135
  %182 = vmatprep.subr.mxu0 0.0
  %183 = vmatpush1.msra.mxu0 %v134
  %184 = vmatprep.subr.mxu0 0.0
  %185 = vmatpush1.msra.mxu0 %v133
  %186 = vmatprep.subr.mxu0 0.0
  %187 = vmatpush1.msra.mxu0 %v132
  %188 = vmatprep.subr.mxu0 0.0
  %189 = vmatpush1.msra.mxu0 %v131
  %190 = vmatprep.subr.mxu0 0.0
  %191 = vmatpush1.msra.mxu0 %v130
  %192 = vmatprep.subr.mxu0 0.0
  %193 = vmatpush1.msra.mxu0 %v129
  %194 = vmatprep.subr.mxu0 0.0
  %195 = vmatpush1.msra.mxu0 %v128
  %196 = vmatprep.subr.mxu0 0.0
  %197 = vmatpush2.msra.mxu0 %v159
  %198 = vmatprep.subr.mxu0 0.0
  %199 = vmatpush2.msra.mxu0 %v158
  %200 = vmatprep.subr.mxu0 0.0
  %201 = vmatpush2.msra.mxu0 %v157
  %202 = vmatprep.subr.mxu0 0.0
  %203 = vmatpush2.msra.mxu0 %v156
  %204 = vmatprep.subr.mxu0 0.0
  %205 = vmatpush2.msra.mxu0 %v155
  %206 = vmatprep.subr.mxu0 0.0
  %207 = vmatpush2.msra.mxu0 %v154
  %208 = vmatprep.subr.mxu0 0.0
  %209 = vmatpush2.msra.mxu0 %v153
  %210 = vmatprep.subr.mxu0 0.0
  %211 = vmatpush2.msra.mxu0 %v152
  %212 = vmatprep.subr.mxu0 0.0
  %213 = vmatpush2.msra.mxu0 %v151
  %214 = vmatprep.subr.mxu0 0.0
  %215 = vmatpush2.msra.mxu0 %v150
  %216 = vmatprep.subr.mxu0 0.0
  %217 = vmatpush2.msra.mxu0 %v149
  %218 = vmatprep.subr.mxu0 0.0
  %219 = vmatpush2.msra.mxu0 %v148
  %220 = vmatprep.subr.mxu0 0.0
  %221 = vmatpush2.msra.mxu0 %v147
  %222 = vmatprep.subr.mxu0 0.0
  %223 = vmatpush2.msra.mxu0 %v146
  %224 = vmatprep.subr.mxu0 0.0
  %225 = vmatpush2.msra.mxu0 %v145
  %226 = vmatprep.subr.mxu0 0.0
  %227 = vmatpush2.msra.mxu0 %v144
  %228 = vmatprep.mubr.f32.mxu0 %v127
  %229 = vmatmul.mubr.f32.gmra.mxu0 %v126
  %v230 = vpop.f32.mrf.mxu0
  %v231 = vadd.f32 %v163, %v230
  %v232 = vpop.f32.mrf.mxu0
  %233 = vdwg.mxu0
  %v234 = vmax.f32 %v231, 0.0
  %v235 = vld [vmem:[%s3] sm:$0xff]
  %v236 = vld [vmem:[%s3 + $0x8] sm:$0xff]
  %v237 = vld [vmem:[%s3 + $0x10] sm:$0xff]
  %v238 = vld [vmem:[%s3 + $0x18] sm:$0xff]
  %v239 = vld [vmem:[%s3 + $0x20] sm:$0xff]
  %v240 = vld [vmem:[%s3 + $0x28] sm:$0xff]
  %v241 = vld [vmem:[%s3 + $0x30] sm:$0xff]
  %v242 = vld [vmem:[%s3 + $0x38] sm:$0xff]
  %v243 = vld [vmem:[%s3 + $0x40] sm:$0xff]
  %v244 = vld [vmem:[%s3 + $0x48] sm:$0xff]
  %v245 = vld [vmem:[%s3 + $0x50] sm:$0xff]
  %v246 = vld [vmem:[%s3 + $0x58] sm:$0xff]
  %v247 = vld [vmem:[%s3 + $0x60] sm:$0xff]
  %v248 = vld [vmem:[%s3 + $0x68] sm:$0xff]
  %v249 = vld [vmem:[%s3 + $0x70] sm:$0xff]
  %v250 = vld [vmem:[%s3 + $0x78] sm:$0xff]
  %v251 = vlaneseq
  %v252 = vshrl.u32 %v251, 7
  %v253 = vsub.s32 0, %v252
  %v254 = vrot.slane %v31, %v253
  %255 = vmatprep.subr.mxu0 0.0
  %256 = vmatpush1.msra.mxu0 %v250
  %257 = vmatprep.subr.mxu0 0.0
  %258 = vmatpush1.msra.mxu0 %v249
  %259 = vmatprep.subr.mxu0 0.0
  %260 = vmatpush1.msra.mxu0 %v248
  %261 = vmatprep.subr.mxu0 0.0
  %262 = vmatpush1.msra.mxu0 %v247
  %263 = vmatprep.subr.mxu0 0.0
  %264 = vmatpush1.msra.mxu0 %v246
  %265 = vmatprep.subr.mxu0 0.0
  %266 = vmatpush1.msra.mxu0 %v245
  %267 = vmatprep.subr.mxu0 0.0
  %268 = vmatpush1.msra.mxu0 %v244
  %269 = vmatprep.subr.mxu0 0.0
  %270 = vmatpush1.msra.mxu0 %v243
  %271 = vmatprep.subr.mxu0 0.0
  %272 = vmatpush1.msra.mxu0 %v242
  %273 = vmatprep.subr.mxu0 0.0
  %274 = vmatpush1.msra.mxu0 %v241
  %275 = vmatprep.subr.mxu0 0.0
  %276 = vmatpush1.msra.mxu0 %v240
  %277 = vmatprep.subr.mxu0 0.0
  %278 = vmatpush1.msra.mxu0 %v239
  %279 = vmatprep.subr.mxu0 0.0
  %280 = vmatpush1.msra.mxu0 %v238
  %281 = vmatprep.subr.mxu0 0.0
  %282 = vmatpush1.msra.mxu0 %v237
  %283 = vmatprep.subr.mxu0 0.0
  %284 = vmatpush1.msra.mxu0 %v236
  %285 = vmatprep.subr.mxu0 0.0
  %286 = vmatpush1.msra.mxu0 %v235
  %287 = vmatprep.subr.mxu0 0.0
  %288 = vmatpush2.msra.mxu0 0.0
  %289 = vmatprep.subr.mxu0 0.0
  %290 = vmatpush2.msra.mxu0 0.0
  %291 = vmatprep.subr.mxu0 0.0
  %292 = vmatpush2.msra.mxu0 0.0
  %293 = vmatprep.subr.mxu0 0.0
  %294 = vmatpush2.msra.mxu0 0.0
  %295 = vmatprep.subr.mxu0 0.0
  %296 = vmatpush2.msra.mxu0 0.0
  %297 = vmatprep.subr.mxu0 0.0
  %298 = vmatpush2.msra.mxu0 0.0
  %299 = vmatprep.subr.mxu0 0.0
  %300 = vmatpush2.msra.mxu0 0.0
  %301 = vmatprep.subr.mxu0 0.0
  %302 = vmatpush2.msra.mxu0 0.0
  %303 = vmatprep.subr.mxu0 0.0
  %304 = vmatpush2.msra.mxu0 0.0
  %305 = vmatprep.subr.mxu0 0.0
  %306 = vmatpush2.msra.mxu0 0.0
  %307 = vmatprep.subr.mxu0 0.0
  %308 = vmatpush2.msra.mxu0 0.0
  %309 = vmatprep.subr.mxu0 0.0
  %310 = vmatpush2.msra.mxu0 0.0
  %311 = vmatprep.subr.mxu0 0.0
  %312 = vmatpush2.msra.mxu0 0.0
  %313 = vmatprep.subr.mxu0 0.0
  %314 = vmatpush2.msra.mxu0 0.0
  %315 = vmatprep.subr.mxu0 0.0
  %316 = vmatpush2.msra.mxu0 0.0
  %317 = vmatprep.subr.mxu0 0.0
  %318 = vmatpush2.msra.mxu0 0.0
  %319 = vmatprep.mubr.f32.mxu0 0.0
  %320 = vmatmul.mubr.f32.gmra.mxu0 %v234
  %v321 = vpop.f32.mrf.mxu0
  %v322 = vadd.f32 %v254, %v321
  %v323 = vpop.f32.mrf.mxu0
  %324 = vdwg.mxu0
  %325 = vst [vmem:[%s5] sm:$0xff] %v322
  // Predicated region
  $region22: #{dqn_multiple_forward.1} parent=0 // pred_check
    _
  $region23: #{dqn_multiple_forward.1} parent=0 // pred_check_branch
    %327 = sbr.rel (0) target = $region25
  $region24: #{dqn_multiple_forward.1} parent=0 // pred_region
    _
  $region25: #{dqn_multiple_forward.1} parent=0 // pred_fallthru
    _
  // Predicated region
  $region26: #{dqn_multiple_forward.1} parent=0 // pred_check
    _
  $region27: #{dqn_multiple_forward.1} parent=0 // pred_check_branch
    %329 = sbr.rel (0) target = $region29
  $region28: #{dqn_multiple_forward.1} parent=0 // pred_region
    _
  $region29: #{dqn_multiple_forward.1} parent=0 // pred_fallthru
    _

</llo_original>
